<compile_context>
chip_gen: v6e
topology: v6e:2x2x1
jax: 0.10.0
libtpu: 0.0.40
codegen_flags: <defaults>
</compile_context>

<pallas_src>
import functools
import numpy as np
import jax
import jax.numpy as jnp
from jax.experimental import pallas as pl
from jax.experimental.pallas import tpu as pltpu


def _mean_kernel(x_ref, o_ref, *, inv_d):
    # x_ref: (D, TR) VMEM  -- reduced dim on sublanes, kept elements on lanes
    # o_ref: (1, TR) VMEM  -- lane-dense mean row (single unmasked store)
    s = jnp.sum(x_ref[...].astype(jnp.float32), axis=0, keepdims=True)
    o_ref[...] = (s * inv_d).astype(o_ref.dtype)


def mean_layer_forward(x, dim):
    """Pallas equivalent of MeanLayer(dim): x.mean(dim=dim, keepdim=True)."""
    ndim = x.ndim
    dim = dim % ndim
    d = x.shape[dim]

    # Move the reduced axis to the front (sublanes); flatten kept axes to lanes.
    xt = jnp.moveaxis(x, dim, 0)
    rest_shape = xt.shape[1:]
    r = int(np.prod(rest_shape)) if rest_shape else 1
    x2 = xt.reshape(d, r)

    # Lane tiling: one full-width block when small, 512-lane tiles when large.
    if r <= 512:
        tr = max(128, 128 * ((r + 127) // 128))
    else:
        tr = 512
    rp = tr * ((r + tr - 1) // tr)
    if rp != r:
        # Zero lane padding; the padded lanes are sliced away after the kernel.
        x2 = jnp.pad(x2, ((0, 0), (0, rp - r)))

    out = pl.pallas_call(
        functools.partial(_mean_kernel, inv_d=1.0 / d),
        out_shape=jax.ShapeDtypeStruct((1, rp), x.dtype),
        grid_spec=pltpu.PrefetchScalarGridSpec(
            num_scalar_prefetch=0,
            grid=(rp // tr,),
            in_specs=[pl.BlockSpec((d, tr), lambda i: (0, i))],
            out_specs=pl.BlockSpec((1, tr), lambda i: (0, i)),
        ),
        compiler_params=pltpu.CompilerParams(dimension_semantics=("parallel",)),
    )(x2)

    # Un-flatten back to the keepdim=True output shape.
    out = out[:, :r].reshape((1,) + rest_shape)
    return jnp.moveaxis(out, 0, dim)


if __name__ == "__main__":
    key = jax.random.PRNGKey(0)
    x = jax.random.normal(key, (2, 4, 16, 16), jnp.float32)

    # MeanLayer(dim=3): mean over the last (time) axis, keepdim=True.
    out = mean_layer_forward(x, dim=3)
    out = jax.block_until_ready(out)
    assert out.shape == (2, 4, 16, 1) and out.dtype == jnp.float32
    ref = jnp.mean(x, axis=3, keepdims=True)
    np.testing.assert_allclose(np.asarray(out), np.asarray(ref), rtol=1e-5, atol=1e-6)

    # MeanLayer is dim-generic; exercise another axis as well.
    out2 = jax.block_until_ready(mean_layer_forward(x, dim=1))
    assert out2.shape == (2, 1, 16, 16)
    ref2 = jnp.mean(x, axis=1, keepdims=True)
    np.testing.assert_allclose(np.asarray(out2), np.asarray(ref2), rtol=1e-5, atol=1e-6)

    print("KERNEL_OK")
</pallas_src>

<mosaic_0001>
module attributes {stable_mosaic.version = 11 : i64} {
  func.func @_mean_kernel(%arg0: i32, %arg1: memref<16x128xf32, #tpu.memory_space<vmem>>, %arg2: memref<1x128xf32, #tpu.memory_space<vmem>>) attributes {dimension_semantics = [#tpu.dimension_semantics<parallel>], iteration_bounds = array<i64: 1>, scalar_prefetch = 0 : i64, scratch_operands = 0 : i64, tpu.core_type = #tpu.core_type<tc>, window_params = [{transform_indices = @transform_0, window_bounds = array<i64: 16, 128>}, {transform_indices = @transform_1, window_bounds = array<i64: 1, 128>}]} {
    %c0 = arith.constant 0 : index
    %c0_0 = arith.constant 0 : index
    %0 = vector.load %arg1[%c0, %c0_0] : memref<16x128xf32, #tpu.memory_space<vmem>>, vector<16x128xf32>
    %cst = arith.constant dense<0.000000e+00> : vector<128xf32>
    %1 = vector.multi_reduction <add>, %0, %cst [0] : vector<16x128xf32> to vector<128xf32>
    %2 = vector.shape_cast %1 : vector<128xf32> to vector<1x128xf32>
    %cst_1 = arith.constant 6.250000e-02 : f32
    %3 = vector.broadcast %cst_1 : f32 to vector<1x128xf32>
    %4 = arith.mulf %2, %3 : vector<1x128xf32>
    %c0_2 = arith.constant 0 : index
    %c0_3 = arith.constant 0 : index
    %5 = vector.load %arg2[%c0_2, %c0_3] : memref<1x128xf32, #tpu.memory_space<vmem>>, vector<1x128xf32>
    tpu.vector_store %arg2[%c0_2, %c0_3], %4 {strides = array<i32>} : memref<1x128xf32, #tpu.memory_space<vmem>>, vector<1x128xf32>,
    return
  }
  func.func @transform_0(%arg0: i32) -> (i32, i32) {
    %c0_i32 = arith.constant 0 : i32
    %c0_i32_0 = arith.constant 0 : i32
    return %c0_i32, %arg0 : i32, i32
  }
  func.func @transform_1(%arg0: i32) -> (i32, i32) {
    %c0_i32 = arith.constant 0 : i32
    %c0_i32_0 = arith.constant 0 : i32
    return %c0_i32, %arg0 : i32, i32
  }
}

</mosaic_0001>

<llo_original>
// kernel: tpu_custom_call.1
$region0: #{tpu_custom_call.1}
  #allocation0 [shape = 'u32[]', space=smem, size = 0x4, offset = 0x4, fixed_abs, tag = 'smem constant byte address 0x4 - core index']
  #allocation1 [shape = 'u32[144,128]{1,0:T(1,128)}', space=vmem, size = 0x12000, scoped, tag = 'internal scratch']
  %s0 = inlined_call_operand.hbm [shape: f32[16,128], index: 0, kind: input, shape index: {}]
  %s1 = inlined_call_operand.hbm [shape: f32[1,128], index: 1, kind: output, shape index: {}]
  %s2 = sld [smem:[#allocation0]]
  $region18: #{tpu_custom_call.1} parent=0
    _
  %s4 = ssub.s32 1, %s2
  %s5 = scalar_select 0, %s4, %s2
  $region1: #{tpu_custom_call.1} parent=0
    #allocation2 [shape = 'u8[8192]{0}', space=vmem, size = 0x2000, scoped, tag = 'input window, operand 0, single buffered']
    #allocation3 [shape = 's32[1]{0}', space=sflag, size = 0x4, scoped, tag = 'scoped memory for tpu_custom_call.1']
    #allocation4 [shape = 's32[1]{0}', space=sflag, size = 0x4, scoped, tag = 'scoped memory for tpu_custom_call.1']
    #allocation5 [shape = 'u8[512]{0}', space=vmem, size = 0x400, scoped, tag = 'output window, operand 0, single buffered']
    %6 = vsyncpa [#allocation3], 0
    %7 = vsyncpa [#allocation4], 0
    // Predicated region
    $region2: #{tpu_custom_call.1} parent=1 // pred_check
      _
    $region3: #{tpu_custom_call.1} parent=1 // pred_check_branch
      %9 = sbr.rel (0) target = $region5
    $region4: #{tpu_custom_call.1} parent=1 // pred_region
      %s11 = ssub.s32 256, 256
      %12 = vsyncadd [#allocation3], %s11
      %s13 = sshll.u32 [#allocation2], 4
      %s14 = int_to_ptr.vmem [resolvable:$true] %s13
      %19 = dma.hbm_to_vmem [thread:$0]  %s0, 256, %s14, [#allocation3], 128, 128, 8
    $region5: #{tpu_custom_call.1} parent=1 // pred_fallthru
      _
    // Predicated region
    $region6: #{tpu_custom_call.1} parent=1 // pred_check
      _
    $region7: #{tpu_custom_call.1} parent=1 // pred_check_branch
      %21 = sbr.rel (0) target = $region9
    $region8: #{tpu_custom_call.1} parent=1 // pred_region
      %22 = dma.done [#allocation3], 256
    $region9: #{tpu_custom_call.1} parent=1 // pred_fallthru
      _
    %v23 = vld [vmem:[#allocation2] sm:$0xff]
    %v24 = vld [vmem:[#allocation2 + $0x8] sm:$0xff]
    %v25 = vadd.f32 %v23, %v24
    %v26 = vrot.slane %v25, 4
    %v27 = vadd.f32 %v25, %v26
    %v28 = vrot.slane %v27, 2
    %v29 = vadd.f32 %v27, %v28
    %v30 = vrot.slane %v29, 1
    %v31 = vadd.f32 %v29, %v30
    %v32 = vmul.f32 %v31, 0.0625
    %33 = vst [vmem:[#allocation5] sm:$0x1] %v32
    // Predicated region
    $region10: #{tpu_custom_call.1} parent=1 // pred_check
      _
    $region11: #{tpu_custom_call.1} parent=1 // pred_check_branch
      %35 = sbr.rel (0) target = $region13
    $region12: #{tpu_custom_call.1} parent=1 // pred_region
      %s37 = ssub.s32 16, 16
      %38 = vsyncadd [#allocation4], %s37
      %s40 = sshll.u32 [#allocation5], 4
      %s41 = int_to_ptr.vmem [resolvable:$true] %s40
      %43 = dma.vmem_to_hbm [thread:$0]  %s41, 16, %s1, [#allocation4]
    $region13: #{tpu_custom_call.1} parent=1 // pred_fallthru
      _
    // Predicated region
    $region14: #{tpu_custom_call.1} parent=1 // pred_check
      _
    $region15: #{tpu_custom_call.1} parent=1 // pred_check_branch
      %45 = sbr.rel (0) target = $region17
    $region16: #{tpu_custom_call.1} parent=1 // pred_region
      %46 = dma.done [#allocation4], 16
    $region17: #{tpu_custom_call.1} parent=1 // pred_fallthru
      _
    %47 = vsyncpa [#allocation3], 1
    %48 = vsyncpa [#allocation4], 1

</llo_original>
